<compile_context>
chip_gen: v5e
topology: v5e:2x2
jax: 0.10.0
libtpu: 0.0.40
codegen_flags: <defaults>
</compile_context>

<pallas_src>
import jax
import jax.numpy as jnp
from jax.experimental import pallas as pl
from jax.experimental.pallas import tpu as pltpu

IN_F = 28 * 28
H1, H2, OUT = 100, 50, 10
PAD = 128  # lane-dense padded width for all hidden/output feature dims


def _mlp_bn_kernel(x_ref, w1_ref, w2_ref, w3_ref, p_ref, o_ref):
    # Whole (small) batch resident in VMEM: one invocation does the full
    # forward pass, including the cross-batch reduction for BatchNorm.
    x = x_ref[...]                      # (B, 784)  bf16
    w1 = w1_ref[...]                    # (784, 128) bf16
    p = p_ref[...]                      # (8, 128)   f32 packed param slab
    b1 = p[0:1, :]
    b2 = p[1:2, :]
    b3 = p[2:3, :]
    gamma = p[3:4, :]
    beta = p[4:5, :]

    # Linear(784 -> 100[pad 128]) + ReLU   (bf16 inputs, f32 accumulation)
    h1 = jnp.dot(x, w1, preferred_element_type=jnp.float32) + b1
    h1 = jnp.maximum(h1, 0.0)

    # Linear(100 -> 50[pad 128]) + ReLU    (f32)
    h2 = jnp.dot(h1, w2_ref[...], preferred_element_type=jnp.float32) + b2
    h2 = jnp.maximum(h2, 0.0)

    # Linear(50 -> 10[pad 128])            (f32)
    h3 = jnp.dot(h2, w3_ref[...], preferred_element_type=jnp.float32) + b3

    # BatchNorm1d(10) training-mode semantics: biased batch statistics, eps=1e-5.
    mean = jnp.mean(h3, axis=0, keepdims=True)
    centered = h3 - mean
    var = jnp.mean(centered * centered, axis=0, keepdims=True)
    scale = jax.lax.rsqrt(var + 1e-5) * gamma     # folded scale: one (B,N) mul saved
    o_ref[...] = centered * scale + beta


def complex_dnn_forward(x_nchw, kernel_params):
    """x_nchw: (B, 1, 28, 28) float32.  Returns (B, 10) float32."""
    B = x_nchw.shape[0]
    # nn.Flatten(): row-major (B, 784); cast to bf16 for the first (big) matmul.
    x2d = x_nchw.reshape(B, IN_F).astype(jnp.bfloat16)
    w1t_p, w2t_p, w3t_p, slab = kernel_params

    vmem = pl.BlockSpec(memory_space=pltpu.MemorySpace.VMEM)
    out_padded = pl.pallas_call(
        _mlp_bn_kernel,
        out_shape=jax.ShapeDtypeStruct((B, PAD), jnp.float32),
        in_specs=[vmem, vmem, vmem, vmem, vmem],
        out_specs=vmem,
    )(x2d, w1t_p, w2t_p, w3t_p, slab)
    return out_padded[:, :OUT]


def init_params(key):
    """PyTorch-default init (uniform +/- 1/sqrt(fan_in); BN gamma=1, beta=0).
    Returns (kernel_params, ref_params): padded/packed kernel-side tensors and
    unpadded reference tensors."""
    ks = jax.random.split(key, 6)

    def linear(kw, kb, fan_in, fan_out):
        bound = 1.0 / float(fan_in) ** 0.5
        w_t = jax.random.uniform(kw, (fan_in, fan_out), jnp.float32, -bound, bound)
        b = jax.random.uniform(kb, (fan_out,), jnp.float32, -bound, bound)
        return w_t, b

    w1t, b1 = linear(ks[0], ks[1], IN_F, H1)
    w2t, b2 = linear(ks[2], ks[3], H1, H2)
    w3t, b3 = linear(ks[4], ks[5], H2, OUT)
    gamma = jnp.ones((OUT,), jnp.float32)
    beta = jnp.zeros((OUT,), jnp.float32)
    ref_params = (w1t, b1, w2t, b2, w3t, b3, gamma, beta)

    def pad2(w, rows, cols):
        return jnp.zeros((rows, cols), jnp.float32).at[: w.shape[0], : w.shape[1]].set(w)

    def pad1(v):
        return jnp.zeros((PAD,), jnp.float32).at[: v.shape[0]].set(v)

    w1t_p = pad2(w1t, IN_F, PAD).astype(jnp.bfloat16)   # big weight: bf16, lane-padded
    w2t_p = pad2(w2t, PAD, PAD)                          # tiny weights: f32, lane-padded
    w3t_p = pad2(w3t, PAD, PAD)

    # Pack all five (K,) vectors into a single (8,128) f32 slab (rows 5..7 unused).
    slab = jnp.zeros((8, PAD), jnp.float32)
    slab = slab.at[0].set(pad1(b1))
    slab = slab.at[1].set(pad1(b2))
    slab = slab.at[2].set(pad1(b3))
    slab = slab.at[3].set(pad1(gamma))
    slab = slab.at[4].set(pad1(beta))

    kernel_params = (w1t_p, w2t_p, w3t_p, slab)
    return kernel_params, ref_params


def reference_forward(x_nchw, ref_params):
    """Pure-JAX reference matching the kernel's math (bf16 first matmul with
    f32 accumulation; everything else f32)."""
    w1t, b1, w2t, b2, w3t, b3, gamma, beta = ref_params
    B = x_nchw.shape[0]
    x = x_nchw.reshape(B, IN_F)
    h = jnp.dot(x.astype(jnp.bfloat16), w1t.astype(jnp.bfloat16),
                preferred_element_type=jnp.float32) + b1
    h = jnp.maximum(h, 0.0)
    h = jnp.maximum(h @ w2t + b2, 0.0)
    h = h @ w3t + b3
    mean = jnp.mean(h, axis=0, keepdims=True)
    var = jnp.mean((h - mean) ** 2, axis=0, keepdims=True)
    return (h - mean) * jax.lax.rsqrt(var + 1e-5) * gamma + beta


if __name__ == "__main__":
    key = jax.random.PRNGKey(0)
    k_x, k_p = jax.random.split(key)

    # Small batch; feature shape fixed by the module (1x28x28 -> 784).
    x = jax.random.normal(k_x, (8, 1, 28, 28), jnp.float32)
    kernel_params, ref_params = init_params(k_p)

    out = complex_dnn_forward(x, kernel_params)
    out = jax.block_until_ready(out)

    ref = reference_forward(x, ref_params)
    assert out.shape == (8, 10), out.shape
    max_err = float(jnp.max(jnp.abs(out - ref)))
    assert jnp.allclose(out, ref, atol=5e-3, rtol=5e-3), max_err

    print("KERNEL_OK")
</pallas_src>

<mosaic_0001>
module attributes {stable_mosaic.version = 11 : i64} {
  func.func @_mlp_bn_kernel(%arg0: memref<8x784xbf16, #tpu.memory_space<vmem>>, %arg1: memref<784x128xbf16, #tpu.memory_space<vmem>>, %arg2: memref<128x128xf32, #tpu.memory_space<vmem>>, %arg3: memref<128x128xf32, #tpu.memory_space<vmem>>, %arg4: memref<8x128xf32, #tpu.memory_space<vmem>>, %arg5: memref<8x128xf32, #tpu.memory_space<vmem>>) attributes {dimension_semantics = [], scalar_prefetch = 0 : i64, scratch_operands = 0 : i64, tpu.core_type = #tpu.core_type<tc>} {
    %c0 = arith.constant 0 : index
    %c0_0 = arith.constant 0 : index
    %0 = vector.load %arg0[%c0, %c0_0] : memref<8x784xbf16, #tpu.memory_space<vmem>>, vector<8x784xbf16>
    %c0_1 = arith.constant 0 : index
    %c0_2 = arith.constant 0 : index
    %1 = vector.load %arg1[%c0_1, %c0_2] : memref<784x128xbf16, #tpu.memory_space<vmem>>, vector<784x128xbf16>
    %c0_3 = arith.constant 0 : index
    %c0_4 = arith.constant 0 : index
    %2 = vector.load %arg4[%c0_3, %c0_4] : memref<8x128xf32, #tpu.memory_space<vmem>>, vector<8x128xf32>
    %3 = vector.extract_strided_slice %2 {offsets = [0, 0], sizes = [1, 128], strides = [1, 1]} : vector<8x128xf32> to vector<1x128xf32>
    %4 = vector.extract_strided_slice %2 {offsets = [1, 0], sizes = [1, 128], strides = [1, 1]} : vector<8x128xf32> to vector<1x128xf32>
    %5 = vector.extract_strided_slice %2 {offsets = [2, 0], sizes = [1, 128], strides = [1, 1]} : vector<8x128xf32> to vector<1x128xf32>
    %6 = vector.extract_strided_slice %2 {offsets = [3, 0], sizes = [1, 128], strides = [1, 1]} : vector<8x128xf32> to vector<1x128xf32>
    %7 = vector.extract_strided_slice %2 {offsets = [4, 0], sizes = [1, 128], strides = [1, 1]} : vector<8x128xf32> to vector<1x128xf32>
    %cst = arith.constant dense<0.000000e+00> : vector<8x128xf32>
    %8 = tpu.matmul %0, %1, %cst {dimension_numbers = #tpu.dot_dimension_numbers<[1], [0], [0], [1], [0, 0, 1, 1], [], []>} : vector<8x784xbf16>, vector<784x128xbf16>, vector<8x128xf32> -> vector<8x128xf32>
    %9 = vector.broadcast %3 : vector<1x128xf32> to vector<8x128xf32>
    %10 = arith.addf %8, %9 : vector<8x128xf32>
    %cst_5 = arith.constant 0.000000e+00 : f32
    %11 = vector.broadcast %cst_5 : f32 to vector<8x128xf32>
    %12 = arith.maximumf %10, %11 : vector<8x128xf32>
    %c0_6 = arith.constant 0 : index
    %c0_7 = arith.constant 0 : index
    %13 = vector.load %arg2[%c0_6, %c0_7] : memref<128x128xf32, #tpu.memory_space<vmem>>, vector<128x128xf32>
    %cst_8 = arith.constant dense<0.000000e+00> : vector<8x128xf32>
    %14 = tpu.matmul %12, %13, %cst_8 {dimension_numbers = #tpu.dot_dimension_numbers<[1], [0], [0], [1], [0, 0, 1, 1], [], []>} : vector<8x128xf32>, vector<128x128xf32>, vector<8x128xf32> -> vector<8x128xf32>
    %15 = vector.broadcast %4 : vector<1x128xf32> to vector<8x128xf32>
    %16 = arith.addf %14, %15 : vector<8x128xf32>
    %cst_9 = arith.constant 0.000000e+00 : f32
    %17 = vector.broadcast %cst_9 : f32 to vector<8x128xf32>
    %18 = arith.maximumf %16, %17 : vector<8x128xf32>
    %c0_10 = arith.constant 0 : index
    %c0_11 = arith.constant 0 : index
    %19 = vector.load %arg3[%c0_10, %c0_11] : memref<128x128xf32, #tpu.memory_space<vmem>>, vector<128x128xf32>
    %cst_12 = arith.constant dense<0.000000e+00> : vector<8x128xf32>
    %20 = tpu.matmul %18, %19, %cst_12 {dimension_numbers = #tpu.dot_dimension_numbers<[1], [0], [0], [1], [0, 0, 1, 1], [], []>} : vector<8x128xf32>, vector<128x128xf32>, vector<8x128xf32> -> vector<8x128xf32>
    %21 = vector.broadcast %5 : vector<1x128xf32> to vector<8x128xf32>
    %22 = arith.addf %20, %21 : vector<8x128xf32>
    %cst_13 = arith.constant dense<0.000000e+00> : vector<128xf32>
    %23 = vector.multi_reduction <add>, %22, %cst_13 [0] : vector<8x128xf32> to vector<128xf32>
    %24 = vector.shape_cast %23 : vector<128xf32> to vector<1x128xf32>
    %cst_14 = arith.constant 8.000000e+00 : f32
    %25 = vector.broadcast %cst_14 : f32 to vector<1x128xf32>
    %26 = arith.divf %24, %25 : vector<1x128xf32>
    %27 = vector.broadcast %26 : vector<1x128xf32> to vector<8x128xf32>
    %28 = arith.subf %22, %27 : vector<8x128xf32>
    %29 = arith.mulf %28, %28 : vector<8x128xf32>
    %cst_15 = arith.constant dense<0.000000e+00> : vector<128xf32>
    %30 = vector.multi_reduction <add>, %29, %cst_15 [0] : vector<8x128xf32> to vector<128xf32>
    %31 = vector.shape_cast %30 : vector<128xf32> to vector<1x128xf32>
    %cst_16 = arith.constant 8.000000e+00 : f32
    %32 = vector.broadcast %cst_16 : f32 to vector<1x128xf32>
    %33 = arith.divf %31, %32 : vector<1x128xf32>
    %cst_17 = arith.constant 9.99999974E-6 : f32
    %34 = vector.broadcast %cst_17 : f32 to vector<1x128xf32>
    %35 = arith.addf %33, %34 : vector<1x128xf32>
    %36 = math.rsqrt %35 : vector<1x128xf32>
    %37 = arith.mulf %36, %6 : vector<1x128xf32>
    %38 = vector.broadcast %37 : vector<1x128xf32> to vector<8x128xf32>
    %39 = arith.mulf %28, %38 : vector<8x128xf32>
    %40 = vector.broadcast %7 : vector<1x128xf32> to vector<8x128xf32>
    %41 = arith.addf %39, %40 : vector<8x128xf32>
    %c0_18 = arith.constant 0 : index
    %c0_19 = arith.constant 0 : index
    %42 = vector.load %arg5[%c0_18, %c0_19] : memref<8x128xf32, #tpu.memory_space<vmem>>, vector<8x128xf32>
    tpu.vector_store %arg5[%c0_18, %c0_19], %41 {strides = array<i32>} : memref<8x128xf32, #tpu.memory_space<vmem>>, vector<8x128xf32>,
    return
  }
}

</mosaic_0001>

<llo_original>
// kernel: tpu_custom_call.1
$region0: #{tpu_custom_call.1}
  #allocation0 [shape = 'u32[]', space=smem, size = 0x4, offset = 0x4, fixed_abs, tag = 'smem constant byte address 0x4 - core index']
  #allocation1 [shape = 'u32[72,128]{1,0:T(1,128)}', space=vmem, size = 0x9000, scoped, tag = 'internal scratch']
  %s0 = inlined_call_operand.hbm [shape: bf16[8,784], index: 0, kind: input, shape index: {}]
  %s1 = inlined_call_operand.hbm [shape: bf16[784,128], index: 1, kind: input, shape index: {}]
  %s2 = inlined_call_operand.hbm [shape: f32[128,128], index: 2, kind: input, shape index: {}]
  %s3 = inlined_call_operand.hbm [shape: f32[128,128], index: 3, kind: input, shape index: {}]
  %s4 = inlined_call_operand.hbm [shape: f32[8,128], index: 4, kind: input, shape index: {}]
  %s5 = inlined_call_operand.hbm [shape: f32[8,128], index: 5, kind: output, shape index: {}]
  %s6 = sld [smem:[#allocation0]]
  $region50: #{tpu_custom_call.1} parent=0
    _
  %s8 = ssub.s32 1, %s6
  %s9 = scalar_select 0, %s8, %s6
  $region1: #{tpu_custom_call.1} parent=0
    #allocation2 [shape = 'u8[14336]{0}', space=vmem, size = 0x3800, scoped, tag = 'input window, operand 0, single buffered']
    #allocation3 [shape = 's32[1]{0}', space=sflag, size = 0x4, scoped, tag = 'scoped memory for tpu_custom_call.1']
    #allocation4 [shape = 's32[1]{0}', space=sflag, size = 0x4, scoped, tag = 'scoped memory for tpu_custom_call.1']
    #allocation5 [shape = 'u8[200704]{0}', space=vmem, size = 0x31000, scoped, tag = 'input window, operand 1, single buffered']
    #allocation6 [shape = 's32[1]{0}', space=sflag, size = 0x4, scoped, tag = 'scoped memory for tpu_custom_call.1']
    #allocation7 [shape = 'u8[65536]{0}', space=vmem, size = 0x10000, scoped, tag = 'input window, operand 2, single buffered']
    #allocation8 [shape = 'u8[65536]{0}', space=vmem, size = 0x10000, scoped, tag = 'input window, operand 3, single buffered']
    #allocation9 [shape = 's32[1]{0}', space=sflag, size = 0x4, scoped, tag = 'scoped memory for tpu_custom_call.1']
    #allocation10 [shape = 'u8[4096]{0}', space=vmem, size = 0x1000, scoped, tag = 'input window, operand 4, single buffered']
    #allocation11 [shape = 'u8[4096]{0}', space=vmem, size = 0x1000, scoped, tag = 'output window, operand 0, single buffered']
    %10 = vsyncpa [#allocation3], 0
    %11 = vsyncpa [#allocation6], 0
    %12 = vsyncpa [#allocation9], 0
    %13 = vsyncpa [#allocation4], 0
    // Predicated region
    $region2: #{tpu_custom_call.1} parent=1 // pred_check
      _
    $region3: #{tpu_custom_call.1} parent=1 // pred_check_branch
      %15 = sbr.rel (0) target = $region5
    $region4: #{tpu_custom_call.1} parent=1 // pred_region
      %17 = vsyncadd [#allocation3], 0
      %s19 = sshll.u32 %s0, 4
      %s20 = int_to_ptr.hbm [resolvable:$true] %s19
      %s21 = sshll.u32 [#allocation2], 4
      %s22 = int_to_ptr.vmem [resolvable:$true] %s21
      %24 = dma.hbm_to_vmem [thread:$0]  %s20, 448, %s22, [#allocation3]
    $region5: #{tpu_custom_call.1} parent=1 // pred_fallthru
      _
    // Predicated region
    $region6: #{tpu_custom_call.1} parent=1 // pred_check
      _
    $region7: #{tpu_custom_call.1} parent=1 // pred_check_branch
      %26 = sbr.rel (0) target = $region9
    $region8: #{tpu_custom_call.1} parent=1 // pred_region
      %28 = vsyncadd [#allocation6], 0
      %s29 = sshll.u32 %s1, 4
      %s30 = int_to_ptr.hbm [resolvable:$true] %s29
      %s31 = sshll.u32 [#allocation5], 4
      %s32 = int_to_ptr.vmem [resolvable:$true] %s31
      %37 = dma.hbm_to_vmem [thread:$0]  %s30, 6272, %s32, [#allocation6], 64, 64, 4
    $region9: #{tpu_custom_call.1} parent=1 // pred_fallthru
      _
    // Predicated region
    $region10: #{tpu_custom_call.1} parent=1 // pred_check
      _
    $region11: #{tpu_custom_call.1} parent=1 // pred_check_branch
      %39 = sbr.rel (0) target = $region13
    $region12: #{tpu_custom_call.1} parent=1 // pred_region
      %41 = vsyncadd [#allocation6], 0
      %s42 = sshll.u32 %s2, 4
      %s43 = int_to_ptr.hbm [resolvable:$true] %s42
      %s44 = sshll.u32 [#allocation7], 4
      %s45 = int_to_ptr.vmem [resolvable:$true] %s44
      %50 = dma.hbm_to_vmem [thread:$0]  %s43, 2048, %s45, [#allocation6], 128, 128, 8
    $region13: #{tpu_custom_call.1} parent=1 // pred_fallthru
      _
    // Predicated region
    $region14: #{tpu_custom_call.1} parent=1 // pred_check
      _
    $region15: #{tpu_custom_call.1} parent=1 // pred_check_branch
      %52 = sbr.rel (0) target = $region17
    $region16: #{tpu_custom_call.1} parent=1 // pred_region
      %54 = vsyncadd [#allocation9], 0
      %s55 = sshll.u32 %s3, 4
      %s56 = int_to_ptr.hbm [resolvable:$true] %s55
      %s57 = sshll.u32 [#allocation8], 4
      %s58 = int_to_ptr.vmem [resolvable:$true] %s57
      %63 = dma.hbm_to_vmem [thread:$0]  %s56, 2048, %s58, [#allocation9], 128, 128, 8
    $region17: #{tpu_custom_call.1} parent=1 // pred_fallthru
      _
    // Predicated region
    $region18: #{tpu_custom_call.1} parent=1 // pred_check
      _
    $region19: #{tpu_custom_call.1} parent=1 // pred_check_branch
      %65 = sbr.rel (0) target = $region21
    $region20: #{tpu_custom_call.1} parent=1 // pred_region
      %67 = vsyncadd [#allocation9], 0
      %s69 = sshll.u32 %s4, 4
      %s70 = int_to_ptr.hbm [resolvable:$true] %s69
      %s71 = sshll.u32 [#allocation10], 4
      %s72 = int_to_ptr.vmem [resolvable:$true] %s71
      %74 = dma.hbm_to_vmem [thread:$0]  %s70, 128, %s72, [#allocation9]
    $region21: #{tpu_custom_call.1} parent=1 // pred_fallthru
      _
    // Predicated region
    $region22: #{tpu_custom_call.1} parent=1 // pred_check
      _
    $region23: #{tpu_custom_call.1} parent=1 // pred_check_branch
      %76 = sbr.rel (0) target = $region25
    $region24: #{tpu_custom_call.1} parent=1 // pred_region
      %78 = dma.done [#allocation3], 448
    $region25: #{tpu_custom_call.1} parent=1 // pred_fallthru
      _
    // Predicated region
    $region26: #{tpu_custom_call.1} parent=1 // pred_check
      _
    $region27: #{tpu_custom_call.1} parent=1 // pred_check_branch
      %80 = sbr.rel (0) target = $region29
    $region28: #{tpu_custom_call.1} parent=1 // pred_region
      %82 = dma.done [#allocation6], 6272
    $region29: #{tpu_custom_call.1} parent=1 // pred_fallthru
      _
    // Predicated region
    $region30: #{tpu_custom_call.1} parent=1 // pred_check
      _
    $region31: #{tpu_custom_call.1} parent=1 // pred_check_branch
      %84 = sbr.rel (0) target = $region33
    $region32: #{tpu_custom_call.1} parent=1 // pred_region
      %86 = dma.done [#allocation6], 2048
    $region33: #{tpu_custom_call.1} parent=1 // pred_fallthru
      _
    // Predicated region
    $region34: #{tpu_custom_call.1} parent=1 // pred_check
      _
    $region35: #{tpu_custom_call.1} parent=1 // pred_check_branch
      %88 = sbr.rel (0) target = $region37
    $region36: #{tpu_custom_call.1} parent=1 // pred_region
      %90 = dma.done [#allocation9], 2048
    $region37: #{tpu_custom_call.1} parent=1 // pred_fallthru
      _
    // Predicated region
    $region38: #{tpu_custom_call.1} parent=1 // pred_check
      _
    $region39: #{tpu_custom_call.1} parent=1 // pred_check_branch
      %92 = sbr.rel (0) target = $region41
    $region40: #{tpu_custom_call.1} parent=1 // pred_region
      %94 = dma.done [#allocation9], 128
    $region41: #{tpu_custom_call.1} parent=1 // pred_fallthru
      _
    %v96 = vld [vmem:[#allocation2] sm:$0xff]
    %v97 = vld [vmem:[#allocation2 + $0x8] sm:$0xff]
    %v98 = vld [vmem:[#allocation2 + $0x10] sm:$0xff]
    %v99 = vld [vmem:[#allocation2 + $0x18] sm:$0xf]
    %v100 = vld [vmem:[#allocation5] sm:$0xf]
    %v101 = vld [vmem:[#allocation5 + $0x4] sm:$0xf]
    %v102 = vld [vmem:[#allocation5 + $0x8] sm:$0xf]
    %v103 = vld [vmem:[#allocation5 + $0xc] sm:$0xf]
    %v104 = vld [vmem:[#allocation5 + $0x10] sm:$0xf]
    %v105 = vld [vmem:[#allocation5 + $0x14] sm:$0xf]
    %v106 = vld [vmem:[#allocation5 + $0x18] sm:$0xf]
    %v107 = vld [vmem:[#allocation5 + $0x1c] sm:$0xf]
    %v108 = vld [vmem:[#allocation5 + $0x20] sm:$0xf]
    %v109 = vld [vmem:[#allocation5 + $0x24] sm:$0xf]
    %v110 = vld [vmem:[#allocation5 + $0x28] sm:$0xf]
    %v111 = vld [vmem:[#allocation5 + $0x2c] sm:$0xf]
    %v112 = vld [vmem:[#allocation5 + $0x30] sm:$0xf]
    %v113 = vld [vmem:[#allocation5 + $0x34] sm:$0xf]
    %v114 = vld [vmem:[#allocation5 + $0x38] sm:$0xf]
    %v115 = vld [vmem:[#allocation5 + $0x3c] sm:$0xf]
    %v116 = vld [vmem:[#allocation5 + $0x40] sm:$0xf]
    %v117 = vld [vmem:[#allocation5 + $0x44] sm:$0xf]
    %v118 = vld [vmem:[#allocation5 + $0x48] sm:$0xf]
    %v119 = vld [vmem:[#allocation5 + $0x4c] sm:$0xf]
    %v120 = vld [vmem:[#allocation5 + $0x50] sm:$0xf]
    %v121 = vld [vmem:[#allocation5 + $0x54] sm:$0xf]
    %v122 = vld [vmem:[#allocation5 + $0x58] sm:$0xf]
    %v123 = vld [vmem:[#allocation5 + $0x5c] sm:$0xf]
    %v124 = vld [vmem:[#allocation5 + $0x60] sm:$0xf]
    %v125 = vld [vmem:[#allocation5 + $0x64] sm:$0xf]
    %v126 = vld [vmem:[#allocation5 + $0x68] sm:$0xf]
    %v127 = vld [vmem:[#allocation5 + $0x6c] sm:$0xf]
    %v128 = vld [vmem:[#allocation5 + $0x70] sm:$0xf]
    %v129 = vld [vmem:[#allocation5 + $0x74] sm:$0xf]
    %v130 = vld [vmem:[#allocation5 + $0x78] sm:$0xf]
    %v131 = vld [vmem:[#allocation5 + $0x7c] sm:$0xf]
    %v132 = vld [vmem:[#allocation5 + $0x80] sm:$0xf]
    %v133 = vld [vmem:[#allocation5 + $0x84] sm:$0xf]
    %v134 = vld [vmem:[#allocation5 + $0x88] sm:$0xf]
    %v135 = vld [vmem:[#allocation5 + $0x8c] sm:$0xf]
    %v136 = vld [vmem:[#allocation5 + $0x90] sm:$0xf]
    %v137 = vld [vmem:[#allocation5 + $0x94] sm:$0xf]
    %v138 = vld [vmem:[#allocation5 + $0x98] sm:$0xf]
    %v139 = vld [vmem:[#allocation5 + $0x9c] sm:$0xf]
    %v140 = vld [vmem:[#allocation5 + $0xa0] sm:$0xf]
    %v141 = vld [vmem:[#allocation5 + $0xa4] sm:$0xf]
    %v142 = vld [vmem:[#allocation5 + $0xa8] sm:$0xf]
    %v143 = vld [vmem:[#allocation5 + $0xac] sm:$0xf]
    %v144 = vld [vmem:[#allocation5 + $0xb0] sm:$0xf]
    %v145 = vld [vmem:[#allocation5 + $0xb4] sm:$0xf]
    %v146 = vld [vmem:[#allocation5 + $0xb8] sm:$0xf]
    %v147 = vld [vmem:[#allocation5 + $0xbc] sm:$0xf]
    %v148 = vld [vmem:[#allocation5 + $0xc0] sm:$0xf]
    %v149 = vld [vmem:[#allocation5 + $0xc4] sm:$0xf]
    %v150 = vld [vmem:[#allocation5 + $0xc8] sm:$0xf]
    %v151 = vld [vmem:[#allocation5 + $0xcc] sm:$0xf]
    %v152 = vld [vmem:[#allocation5 + $0xd0] sm:$0xf]
    %v153 = vld [vmem:[#allocation5 + $0xd4] sm:$0xf]
    %v154 = vld [vmem:[#allocation5 + $0xd8] sm:$0xf]
    %v155 = vld [vmem:[#allocation5 + $0xdc] sm:$0xf]
    %v156 = vld [vmem:[#allocation5 + $0xe0] sm:$0xf]
    %v157 = vld [vmem:[#allocation5 + $0xe4] sm:$0xf]
    %v158 = vld [vmem:[#allocation5 + $0xe8] sm:$0xf]
    %v159 = vld [vmem:[#allocation5 + $0xec] sm:$0xf]
    %v160 = vld [vmem:[#allocation5 + $0xf0] sm:$0xf]
    %v161 = vld [vmem:[#allocation5 + $0xf4] sm:$0xf]
    %v162 = vld [vmem:[#allocation5 + $0xf8] sm:$0xf]
    %v163 = vld [vmem:[#allocation5 + $0xfc] sm:$0xf]
    %v164 = vld [vmem:[#allocation5 + $0x100] sm:$0xf]
    %v165 = vld [vmem:[#allocation5 + $0x104] sm:$0xf]
    %v166 = vld [vmem:[#allocation5 + $0x108] sm:$0xf]
    %v167 = vld [vmem:[#allocation5 + $0x10c] sm:$0xf]
    %v168 = vld [vmem:[#allocation5 + $0x110] sm:$0xf]
    %v169 = vld [vmem:[#allocation5 + $0x114] sm:$0xf]
    %v170 = vld [vmem:[#allocation5 + $0x118] sm:$0xf]
    %v171 = vld [vmem:[#allocation5 + $0x11c] sm:$0xf]
    %v172 = vld [vmem:[#allocation5 + $0x120] sm:$0xf]
    %v173 = vld [vmem:[#allocation5 + $0x124] sm:$0xf]
    %v174 = vld [vmem:[#allocation5 + $0x128] sm:$0xf]
    %v175 = vld [vmem:[#allocation5 + $0x12c] sm:$0xf]
    %v176 = vld [vmem:[#allocation5 + $0x130] sm:$0xf]
    %v177 = vld [vmem:[#allocation5 + $0x134] sm:$0xf]
    %v178 = vld [vmem:[#allocation5 + $0x138] sm:$0xf]
    %v179 = vld [vmem:[#allocation5 + $0x13c] sm:$0xf]
    %v180 = vld [vmem:[#allocation5 + $0x140] sm:$0xf]
    %v181 = vld [vmem:[#allocation5 + $0x144] sm:$0xf]
    %v182 = vld [vmem:[#allocation5 + $0x148] sm:$0xf]
    %v183 = vld [vmem:[#allocation5 + $0x14c] sm:$0xf]
    %v184 = vld [vmem:[#allocation5 + $0x150] sm:$0xf]
    %v185 = vld [vmem:[#allocation5 + $0x154] sm:$0xf]
    %v186 = vld [vmem:[#allocation5 + $0x158] sm:$0xf]
    %v187 = vld [vmem:[#allocation5 + $0x15c] sm:$0xf]
    %v188 = vld [vmem:[#allocation5 + $0x160] sm:$0xf]
    %v189 = vld [vmem:[#allocation5 + $0x164] sm:$0xf]
    %v190 = vld [vmem:[#allocation5 + $0x168] sm:$0xf]
    %v191 = vld [vmem:[#allocation5 + $0x16c] sm:$0xf]
    %v192 = vld [vmem:[#allocation5 + $0x170] sm:$0xf]
    %v193 = vld [vmem:[#allocation5 + $0x174] sm:$0xf]
    %v194 = vld [vmem:[#allocation5 + $0x178] sm:$0xf]
    %v195 = vld [vmem:[#allocation5 + $0x17c] sm:$0xf]
    %v196 = vld [vmem:[#allocation5 + $0x180] sm:$0xf]
    %v197 = vld [vmem:[#allocation5 + $0x184] sm:$0xf]
    %v198 = vld [vmem:[#allocation10] sm:$0xff]
    %v199 = vperm.slane %v198, 0
    %v204 = vunpack.c.l.b16 %v96
    %v205 = vunpack.c.h.b16 %v96
    %v206 = vunpack.c.l.b16 %v97
    %v207 = vunpack.c.h.b16 %v97
    %v208 = vunpack.c.l.b16 %v98
    %v209 = vunpack.c.h.b16 %v98
    %v210 = vunpack.c.l.b16 %v99
    %v211 = vpack.c.b16 %v204, %v204
    %v212 = vpack.c.b16 %v205, %v205
    %v213 = vpack.c.b16 %v206, %v206
    %v214 = vpack.c.b16 %v207, %v207
    %v215 = vpack.c.b16 %v208, %v208
    %v216 = vpack.c.b16 %v209, %v209
    %v217 = vpack.c.b16 %v210, %v210
    %v322 = vunpack.c.l.b16 %v100
    %v323 = vunpack.c.l.b16 %v101
    %v324 = vunpack.c.l.b16 %v102
    %v325 = vunpack.c.l.b16 %v103
    %v326 = vunpack.c.l.b16 %v104
    %v327 = vunpack.c.l.b16 %v105
    %v328 = vunpack.c.l.b16 %v106
    %v329 = vunpack.c.l.b16 %v107
    %v330 = vunpack.c.l.b16 %v108
    %v331 = vunpack.c.l.b16 %v109
    %v332 = vunpack.c.l.b16 %v110
    %v333 = vunpack.c.l.b16 %v111
    %v334 = vunpack.c.l.b16 %v112
    %v335 = vunpack.c.l.b16 %v113
    %v336 = vunpack.c.l.b16 %v114
    %v337 = vunpack.c.l.b16 %v115
    %v338 = vunpack.c.l.b16 %v116
    %v339 = vunpack.c.l.b16 %v117
    %v340 = vunpack.c.l.b16 %v118
    %v341 = vunpack.c.l.b16 %v119
    %v342 = vunpack.c.l.b16 %v120
    %v343 = vunpack.c.l.b16 %v121
    %v344 = vunpack.c.l.b16 %v122
    %v345 = vunpack.c.l.b16 %v123
    %v346 = vunpack.c.l.b16 %v124
    %v347 = vunpack.c.l.b16 %v125
    %v348 = vunpack.c.l.b16 %v126
    %v349 = vunpack.c.l.b16 %v127
    %v350 = vunpack.c.l.b16 %v128
    %v351 = vunpack.c.l.b16 %v129
    %v352 = vunpack.c.l.b16 %v130
    %v353 = vunpack.c.l.b16 %v131
    %v354 = vunpack.c.l.b16 %v132
    %v355 = vunpack.c.l.b16 %v133
    %v356 = vunpack.c.l.b16 %v134
    %v357 = vunpack.c.l.b16 %v135
    %v358 = vunpack.c.l.b16 %v136
    %v359 = vunpack.c.l.b16 %v137
    %v360 = vunpack.c.l.b16 %v138
    %v361 = vunpack.c.l.b16 %v139
    %v362 = vunpack.c.l.b16 %v140
    %v363 = vunpack.c.l.b16 %v141
    %v364 = vunpack.c.l.b16 %v142
    %v365 = vunpack.c.l.b16 %v143
    %v366 = vunpack.c.l.b16 %v144
    %v367 = vunpack.c.l.b16 %v145
    %v368 = vunpack.c.l.b16 %v146
    %v369 = vunpack.c.l.b16 %v147
    %v370 = vunpack.c.l.b16 %v148
    %v371 = vunpack.c.l.b16 %v149
    %v372 = vunpack.c.l.b16 %v150
    %v373 = vunpack.c.l.b16 %v151
    %v374 = vunpack.c.l.b16 %v152
    %v375 = vunpack.c.l.b16 %v153
    %v376 = vunpack.c.l.b16 %v154
    %v377 = vunpack.c.l.b16 %v155
    %v378 = vunpack.c.l.b16 %v156
    %v379 = vunpack.c.l.b16 %v157
    %v380 = vunpack.c.l.b16 %v158
    %v381 = vunpack.c.l.b16 %v159
    %v382 = vunpack.c.l.b16 %v160
    %v383 = vunpack.c.l.b16 %v161
    %v384 = vunpack.c.l.b16 %v162
    %v385 = vunpack.c.l.b16 %v163
    %v386 = vunpack.c.l.b16 %v164
    %v387 = vunpack.c.l.b16 %v165
    %v388 = vunpack.c.l.b16 %v166
    %v389 = vunpack.c.l.b16 %v167
    %v390 = vunpack.c.l.b16 %v168
    %v391 = vunpack.c.l.b16 %v169
    %v392 = vunpack.c.l.b16 %v170
    %v393 = vunpack.c.l.b16 %v171
    %v394 = vunpack.c.l.b16 %v172
    %v395 = vunpack.c.l.b16 %v173
    %v396 = vunpack.c.l.b16 %v174
    %v397 = vunpack.c.l.b16 %v175
    %v398 = vunpack.c.l.b16 %v176
    %v399 = vunpack.c.l.b16 %v177
    %v400 = vunpack.c.l.b16 %v178
    %v401 = vunpack.c.l.b16 %v179
    %v402 = vunpack.c.l.b16 %v180
    %v403 = vunpack.c.l.b16 %v181
    %v404 = vunpack.c.l.b16 %v182
    %v405 = vunpack.c.l.b16 %v183
    %v406 = vunpack.c.l.b16 %v184
    %v407 = vunpack.c.l.b16 %v185
    %v408 = vunpack.c.l.b16 %v186
    %v409 = vunpack.c.l.b16 %v187
    %v410 = vunpack.c.l.b16 %v188
    %v411 = vunpack.c.l.b16 %v189
    %v412 = vunpack.c.l.b16 %v190
    %v413 = vunpack.c.l.b16 %v191
    %v414 = vunpack.c.l.b16 %v192
    %v415 = vunpack.c.l.b16 %v193
    %v416 = vunpack.c.l.b16 %v194
    %v417 = vunpack.c.l.b16 %v195
    %v418 = vunpack.c.l.b16 %v196
    %v419 = vunpack.c.l.b16 %v197
    %v420 = vpack.c.b16 %v323, %v322
    %v421 = vpack.c.b16 %v325, %v324
    %v422 = vpack.c.b16 %v327, %v326
    %v423 = vpack.c.b16 %v329, %v328
    %v424 = vpack.c.b16 %v331, %v330
    %v425 = vpack.c.b16 %v333, %v332
    %v426 = vpack.c.b16 %v335, %v334
    %v427 = vpack.c.b16 %v337, %v336
    %v428 = vpack.c.b16 %v339, %v338
    %v429 = vpack.c.b16 %v341, %v340
    %v430 = vpack.c.b16 %v343, %v342
    %v431 = vpack.c.b16 %v345, %v344
    %v432 = vpack.c.b16 %v347, %v346
    %v433 = vpack.c.b16 %v349, %v348
    %v434 = vpack.c.b16 %v351, %v350
    %v435 = vpack.c.b16 %v353, %v352
    %v436 = vpack.c.b16 %v355, %v354
    %v437 = vpack.c.b16 %v357, %v356
    %v438 = vpack.c.b16 %v359, %v358
    %v439 = vpack.c.b16 %v361, %v360
    %v440 = vpack.c.b16 %v363, %v362
    %v441 = vpack.c.b16 %v365, %v364
    %v442 = vpack.c.b16 %v367, %v366
    %v443 = vpack.c.b16 %v369, %v368
    %v444 = vpack.c.b16 %v371, %v370
    %v445 = vpack.c.b16 %v373, %v372
    %v446 = vpack.c.b16 %v375, %v374
    %v447 = vpack.c.b16 %v377, %v376
    %v448 = vpack.c.b16 %v379, %v378
    %v449 = vpack.c.b16 %v381, %v380
    %v450 = vpack.c.b16 %v383, %v382
    %v451 = vpack.c.b16 %v385, %v384
    %v452 = vpack.c.b16 %v387, %v386
    %v453 = vpack.c.b16 %v389, %v388
    %v454 = vpack.c.b16 %v391, %v390
    %v455 = vpack.c.b16 %v393, %v392
    %v456 = vpack.c.b16 %v395, %v394
    %v457 = vpack.c.b16 %v397, %v396
    %v458 = vpack.c.b16 %v399, %v398
    %v459 = vpack.c.b16 %v401, %v400
    %v460 = vpack.c.b16 %v403, %v402
    %v461 = vpack.c.b16 %v405, %v404
    %v462 = vpack.c.b16 %v407, %v406
    %v463 = vpack.c.b16 %v409, %v408
    %v464 = vpack.c.b16 %v411, %v410
    %v465 = vpack.c.b16 %v413, %v412
    %v466 = vpack.c.b16 %v415, %v414
    %v467 = vpack.c.b16 %v417, %v416
    %v468 = vpack.c.b16 %v419, %v418
    %vm518 = vcmask 130048
    %v520 = vsel %vm518, %v217, 0
    %522 = vmatpush.bf16.msra.mxu0 %v427
    %523 = vmatpush.bf16.msra.mxu0 %v426
    %524 = vmatpush.bf16.msra.mxu0 %v425
    %525 = vmatpush.bf16.msra.mxu0 %v424
    %526 = vmatpush.bf16.msra.mxu0 %v423
    %527 = vmatpush.bf16.msra.mxu0 %v422
    %528 = vmatpush.bf16.msra.mxu0 %v421
    %529 = vmatpush.bf16.msra.mxu0 %v420
    %530 = vmatmul.bf16.gmra.mxu0 %v211
    %v531 = vpop.f32.mrf.mxu0
    %v532 = vadd.f32 %v199, %v531
    %v533 = vpop.f32.mrf.mxu0
    %534 = vdwg.mxu0
    %535 = vmatpush.bf16.msra.mxu0 %v435
    %536 = vmatpush.bf16.msra.mxu0 %v434
    %537 = vmatpush.bf16.msra.mxu0 %v433
    %538 = vmatpush.bf16.msra.mxu0 %v432
    %539 = vmatpush.bf16.msra.mxu0 %v431
    %540 = vmatpush.bf16.msra.mxu0 %v430
    %541 = vmatpush.bf16.msra.mxu0 %v429
    %542 = vmatpush.bf16.msra.mxu0 %v428
    %543 = vmatmul.bf16.gmra.mxu0 %v212
    %v544 = vpop.f32.mrf.mxu0
    %v545 = vadd.f32 %v532, %v544
    %v546 = vpop.f32.mrf.mxu0
    %547 = vdwg.mxu0
    %548 = vmatpush.bf16.msra.mxu0 %v443
    %549 = vmatpush.bf16.msra.mxu0 %v442
    %550 = vmatpush.bf16.msra.mxu0 %v441
    %551 = vmatpush.bf16.msra.mxu0 %v440
    %552 = vmatpush.bf16.msra.mxu0 %v439
    %553 = vmatpush.bf16.msra.mxu0 %v438
    %554 = vmatpush.bf16.msra.mxu0 %v437
    %555 = vmatpush.bf16.msra.mxu0 %v436
    %556 = vmatmul.bf16.gmra.mxu0 %v213
    %v557 = vpop.f32.mrf.mxu0
    %v558 = vadd.f32 %v545, %v557
    %v559 = vpop.f32.mrf.mxu0
    %560 = vdwg.mxu0
    %561 = vmatpush.bf16.msra.mxu0 %v451
    %562 = vmatpush.bf16.msra.mxu0 %v450
    %563 = vmatpush.bf16.msra.mxu0 %v449
    %564 = vmatpush.bf16.msra.mxu0 %v448
    %565 = vmatpush.bf16.msra.mxu0 %v447
    %566 = vmatpush.bf16.msra.mxu0 %v446
    %567 = vmatpush.bf16.msra.mxu0 %v445
    %568 = vmatpush.bf16.msra.mxu0 %v444
    %569 = vmatmul.bf16.gmra.mxu0 %v214
    %v570 = vpop.f32.mrf.mxu0
    %v571 = vadd.f32 %v558, %v570
    %v572 = vpop.f32.mrf.mxu0
    %573 = vdwg.mxu0
    %574 = vmatpush.bf16.msra.mxu0 %v459
    %575 = vmatpush.bf16.msra.mxu0 %v458
    %576 = vmatpush.bf16.msra.mxu0 %v457
    %577 = vmatpush.bf16.msra.mxu0 %v456
    %578 = vmatpush.bf16.msra.mxu0 %v455
    %579 = vmatpush.bf16.msra.mxu0 %v454
    %580 = vmatpush.bf16.msra.mxu0 %v453
    %581 = vmatpush.bf16.msra.mxu0 %v452
    %582 = vmatmul.bf16.gmra.mxu0 %v215
    %v583 = vpop.f32.mrf.mxu0
    %v584 = vadd.f32 %v571, %v583
    %v585 = vpop.f32.mrf.mxu0
    %586 = vdwg.mxu0
    %587 = vmatpush.bf16.msra.mxu0 %v467
    %588 = vmatpush.bf16.msra.mxu0 %v466
    %589 = vmatpush.bf16.msra.mxu0 %v465
    %590 = vmatpush.bf16.msra.mxu0 %v464
    %591 = vmatpush.bf16.msra.mxu0 %v463
    %592 = vmatpush.bf16.msra.mxu0 %v462
    %593 = vmatpush.bf16.msra.mxu0 %v461
    %594 = vmatpush.bf16.msra.mxu0 %v460
    %595 = vmatmul.bf16.gmra.mxu0 %v216
    %v596 = vpop.f32.mrf.mxu0
    %v597 = vadd.f32 %v584, %v596
    %v598 = vpop.f32.mrf.mxu0
    %599 = vdwg.mxu0
    %600 = vmatpush.bf16.msra.mxu0 0
    %601 = vmatpush.bf16.msra.mxu0 0
    %602 = vmatpush.bf16.msra.mxu0 0
    %603 = vmatpush.bf16.msra.mxu0 0
    %604 = vmatpush.bf16.msra.mxu0 0
    %605 = vmatpush.bf16.msra.mxu0 0
    %606 = vmatpush.bf16.msra.mxu0 0
    %607 = vmatpush.bf16.msra.mxu0 %v468
    %608 = vmatmul.bf16.gmra.mxu0 %v520
    %v609 = vpop.f32.mrf.mxu0
    %v610 = vadd.f32 %v597, %v609
    %v611 = vpop.f32.mrf.mxu0
    %612 = vdwg.mxu0
    %v613 = vmax.f32 %v610, 0.0
    %v614 = vld [vmem:[#allocation7] sm:$0xff]
    %v615 = vld [vmem:[#allocation7 + $0x8] sm:$0xff]
    %v616 = vld [vmem:[#allocation7 + $0x10] sm:$0xff]
    %v617 = vld [vmem:[#allocation7 + $0x18] sm:$0xff]
    %v618 = vld [vmem:[#allocation7 + $0x20] sm:$0xff]
    %v619 = vld [vmem:[#allocation7 + $0x28] sm:$0xff]
    %v620 = vld [vmem:[#allocation7 + $0x30] sm:$0xff]
    %v621 = vld [vmem:[#allocation7 + $0x38] sm:$0xff]
    %v622 = vld [vmem:[#allocation7 + $0x40] sm:$0xff]
    %v623 = vld [vmem:[#allocation7 + $0x48] sm:$0xff]
    %v624 = vld [vmem:[#allocation7 + $0x50] sm:$0xff]
    %v625 = vld [vmem:[#allocation7 + $0x58] sm:$0xff]
    %v626 = vld [vmem:[#allocation7 + $0x60] sm:$0xff]
    %v627 = vld [vmem:[#allocation7 + $0x68] sm:$0xff]
    %v628 = vld [vmem:[#allocation7 + $0x70] sm:$0xff]
    %v629 = vld [vmem:[#allocation7 + $0x78] sm:$0xff]
    %v630 = vperm.slane %v198, 1
    %631 = vmatpush.msra.mxu0 %v629
    %632 = vmatpush.msra.mxu0 %v628
    %633 = vmatpush.msra.mxu0 %v627
    %634 = vmatpush.msra.mxu0 %v626
    %635 = vmatpush.msra.mxu0 %v625
    %636 = vmatpush.msra.mxu0 %v624
    %637 = vmatpush.msra.mxu0 %v623
    %638 = vmatpush.msra.mxu0 %v622
    %639 = vmatpush.msra.mxu0 %v621
    %640 = vmatpush.msra.mxu0 %v620
    %641 = vmatpush.msra.mxu0 %v619
    %642 = vmatpush.msra.mxu0 %v618
    %643 = vmatpush.msra.mxu0 %v617
    %644 = vmatpush.msra.mxu0 %v616
    %645 = vmatpush.msra.mxu0 %v615
    %646 = vmatpush.msra.mxu0 %v614
    %647 = vmatmul.f32.gmra.mxu0 %v613
    %v648 = vpop.f32.mrf.mxu0
    %v649 = vadd.f32 %v630, %v648
    %650 = vdwg.mxu0
    %v651 = vmax.f32 %v649, 0.0
    %v652 = vld [vmem:[#allocation8] sm:$0xff]
    %v653 = vld [vmem:[#allocation8 + $0x8] sm:$0xff]
    %v654 = vld [vmem:[#allocation8 + $0x10] sm:$0xff]
    %v655 = vld [vmem:[#allocation8 + $0x18] sm:$0xff]
    %v656 = vld [vmem:[#allocation8 + $0x20] sm:$0xff]
    %v657 = vld [vmem:[#allocation8 + $0x28] sm:$0xff]
    %v658 = vld [vmem:[#allocation8 + $0x30] sm:$0xff]
    %v659 = vld [vmem:[#allocation8 + $0x38] sm:$0xff]
    %v660 = vld [vmem:[#allocation8 + $0x40] sm:$0xff]
    %v661 = vld [vmem:[#allocation8 + $0x48] sm:$0xff]
    %v662 = vld [vmem:[#allocation8 + $0x50] sm:$0xff]
    %v663 = vld [vmem:[#allocation8 + $0x58] sm:$0xff]
    %v664 = vld [vmem:[#allocation8 + $0x60] sm:$0xff]
    %v665 = vld [vmem:[#allocation8 + $0x68] sm:$0xff]
    %v666 = vld [vmem:[#allocation8 + $0x70] sm:$0xff]
    %v667 = vld [vmem:[#allocation8 + $0x78] sm:$0xff]
    %v668 = vperm.slane %v198, 2
    %669 = vmatpush.msra.mxu0 %v667
    %670 = vmatpush.msra.mxu0 %v666
    %671 = vmatpush.msra.mxu0 %v665
    %672 = vmatpush.msra.mxu0 %v664
    %673 = vmatpush.msra.mxu0 %v663
    %674 = vmatpush.msra.mxu0 %v662
    %675 = vmatpush.msra.mxu0 %v661
    %676 = vmatpush.msra.mxu0 %v660
    %677 = vmatpush.msra.mxu0 %v659
    %678 = vmatpush.msra.mxu0 %v658
    %679 = vmatpush.msra.mxu0 %v657
    %680 = vmatpush.msra.mxu0 %v656
    %681 = vmatpush.msra.mxu0 %v655
    %682 = vmatpush.msra.mxu0 %v654
    %683 = vmatpush.msra.mxu0 %v653
    %684 = vmatpush.msra.mxu0 %v652
    %685 = vmatmul.f32.gmra.mxu0 %v651
    %v686 = vpop.f32.mrf.mxu0
    %v687 = vadd.f32 %v668, %v686
    %688 = vdwg.mxu0
    %v689 = vrot.slane %v687, 4
    %v690 = vadd.f32 %v687, %v689
    %v691 = vrot.slane %v690, 2
    %v692 = vadd.f32 %v690, %v691
    %v693 = vrot.slane %v692, 1
    %v694 = vadd.f32 %v692, %v693
    %v695 = vrcp.pop 8.0
    %v696 = vmul.f32 8.0, %v695
    %v697 = vsub.f32 1.0, %v696
    %v698 = vmul.f32 %v695, %v697
    %v699 = vadd.f32 %v695, %v698
    %vm700 = vweird.f32 %v695
    %v701 = vsel %vm700, %v695, %v699
    %v702 = vmul.f32 %v694, %v701
    %v703 = vsub.f32 %v687, %v702
    %v704 = vmul.f32 %v703, %v703
    %v705 = vrot.slane %v704, 4
    %v706 = vadd.f32 %v704, %v705
    %v707 = vrot.slane %v706, 2
    %v708 = vadd.f32 %v706, %v707
    %v709 = vrot.slane %v708, 1
    %v710 = vadd.f32 %v708, %v709
    %v711 = vmul.f32 %v710, %v701
    %v712 = vadd.f32 %v711, 1e-05
    %v713 = vrsqrt.pop %v712
    %v714 = vmul.f32 %v713, %v712
    %v715 = vmul.f32 %v714, %v713
    %v716 = vmul.f32 0.5, %v715
    %v717 = vsub.f32 1.5, %v716
    %v718 = vmul.f32 %v713, %v717
    %vm719 = vweird.f32 %v712
    %vm720 = vweird.f32 %v713
    %vm721 = vmor %vm719, %vm720
    %v722 = vsel %vm721, %v713, %v718
    %v723 = vmul.f32 %v722, %v198
    %v724 = vperm.slane %v723, 3
    %v725 = vmul.f32 %v703, %v724
    %v726 = vperm.slane %v198, 4
    %v727 = vadd.f32 %v725, %v726
    %728 = vst [vmem:[#allocation11] sm:$0xff] %v727
    // Predicated region
    $region42: #{tpu_custom_call.1} parent=1 // pred_check
      _
    $region43: #{tpu_custom_call.1} parent=1 // pred_check_branch
      %730 = sbr.rel (0) target = $region45
    $region44: #{tpu_custom_call.1} parent=1 // pred_region
      %732 = vsyncadd [#allocation4], 0
      %s734 = sshll.u32 [#allocation11], 4
      %s735 = int_to_ptr.vmem [resolvable:$true] %s734
      %s736 = sshll.u32 %s5, 4
      %s737 = int_to_ptr.hbm [resolvable:$true] %s736
      %739 = dma.vmem_to_hbm [thread:$0]  %s735, 128, %s737, [#allocation4]
    $region45: #{tpu_custom_call.1} parent=1 // pred_fallthru
      _
    // Predicated region
    $region46: #{tpu_custom_call.1} parent=1 // pred_check
      _
    $region47: #{tpu_custom_call.1} parent=1 // pred_check_branch
      %741 = sbr.rel (0) target = $region49
    $region48: #{tpu_custom_call.1} parent=1 // pred_region
      %743 = dma.done [#allocation4], 128
    $region49: #{tpu_custom_call.1} parent=1 // pred_fallthru
      _
    %744 = vsyncpa [#allocation3], 1
    %745 = vsyncpa [#allocation6], 1
    %746 = vsyncpa [#allocation9], 1
    %747 = vsyncpa [#allocation4], 1

</llo_original>
